<compile_context>
chip_gen: v7x
topology: tpu7x:2x2x1
jax: 0.10.0
libtpu: 0.0.40
codegen_flags: <defaults>
</compile_context>

<pallas_src>
import jax
import jax.numpy as jnp
from jax.experimental import pallas as pl
from jax.experimental.pallas import tpu as pltpu

D_IN, H1, H2, D_OUT = 256, 64, 16, 4


def mlp_kernel(x_ref, w1_ref, b1_ref, w2_ref, b2_ref, w3_ref, b3_ref, o_ref):
    x = x_ref[...]                                                    # (TB, 256)

    # Linear(256, 64) + ReLU   (MXU matmul, f32 accumulate)
    h1 = jnp.dot(x, w1_ref[...], preferred_element_type=jnp.float32) + b1_ref[...]
    h1 = jnp.maximum(h1, 0.0)

    # Linear(64, 16) + Tanh    (tanh -> EUP)
    h2 = jnp.dot(h1, w2_ref[...], preferred_element_type=jnp.float32) + b2_ref[...]
    h2 = jnp.tanh(h2)

    # Linear(16, 4)
    logits = jnp.dot(h2, w3_ref[...], preferred_element_type=jnp.float32) + b3_ref[...]

    # Numerically-stable softmax over dim=1 (feature axis).
    m = jnp.max(logits, axis=-1, keepdims=True)
    e = jnp.exp(logits - m)                                           # exp -> EUP
    denom = jnp.sum(e, axis=-1, keepdims=True)
    o_ref[...] = e * pl.reciprocal(denom, approx=True)                # recip -> EUP


def _pick_tile(batch, max_tile):
    """Batch tile: as big as allowed (HBM roofline), multiple of 8 (sublane)
    unless a single tile covers the whole batch."""
    if batch <= max_tile:
        return batch
    tb = (max_tile // 8) * 8
    return max(tb, 8)


def simple_model_linear(x, params, *, tile_b=1024):
    B = x.shape[0]
    w1, b1, w2, b2, w3, b3 = params

    tb = _pick_tile(B, tile_b)
    grid = (pl.cdiv(B, tb),)

    full = lambda shape: pl.BlockSpec(shape, lambda i: (0, 0))

    flops = 2 * B * (D_IN * H1 + H1 * H2 + H2 * D_OUT)
    transcendentals = B * (H2 + D_OUT + 1)              # tanh + exp + approx recip
    bytes_accessed = (
        B * D_IN * 4 + B * D_OUT * 4 +                  # x in, softmax out
        (D_IN * H1 + H1 + H1 * H2 + H2 + H2 * D_OUT + D_OUT) * 4  # weights/biases
    )

    return pl.pallas_call(
        mlp_kernel,
        out_shape=jax.ShapeDtypeStruct((B, D_OUT), jnp.float32),
        grid_spec=pltpu.PrefetchScalarGridSpec(
            num_scalar_prefetch=0,
            grid=grid,
            in_specs=[
                pl.BlockSpec((tb, D_IN), lambda i: (i, 0)),           # streamed x tile
                full((D_IN, H1)),                                     # w1 (resident)
                full((1, H1)),                                        # b1
                full((H1, H2)),                                       # w2
                full((1, H2)),                                        # b2
                full((H2, D_OUT)),                                    # w3
                full((1, D_OUT)),                                     # b3
            ],
            out_specs=pl.BlockSpec((tb, D_OUT), lambda i: (i, 0)),
        ),
        compiler_params=pltpu.CompilerParams(
            dimension_semantics=("parallel",),          # megacore: shard batch tiles
        ),
        cost_estimate=pl.CostEstimate(
            flops=flops,
            transcendentals=transcendentals,
            bytes_accessed=bytes_accessed,
        ),
    )(x, w1, b1, w2, b2, w3, b3)


def init_params(key):
    # Deterministic synthetic parameters (PyTorch-style uniform fan-in init).
    ks = jax.random.split(key, 6)

    def linear(kw, kb, fan_in, fan_out):
        bound = 1.0 / jnp.sqrt(fan_in)
        w = jax.random.uniform(kw, (fan_in, fan_out), jnp.float32, -bound, bound)
        b = jax.random.uniform(kb, (1, fan_out), jnp.float32, -bound, bound)
        return w, b

    w1, b1 = linear(ks[0], ks[1], D_IN, H1)
    w2, b2 = linear(ks[2], ks[3], H1, H2)
    w3, b3 = linear(ks[4], ks[5], H2, D_OUT)
    return (w1, b1, w2, b2, w3, b3)


def reference(x, params):
    w1, b1, w2, b2, w3, b3 = params
    h1 = jnp.maximum(x @ w1 + b1, 0.0)
    h2 = jnp.tanh(h1 @ w2 + b2)
    logits = h2 @ w3 + b3
    return jax.nn.softmax(logits, axis=1)


if __name__ == "__main__":
    key = jax.random.PRNGKey(0)
    k_x, k_x2, k_p = jax.random.split(key, 3)
    params = init_params(k_p)

    # Small batch (single full tile).
    B = 8
    x = jax.random.normal(k_x, (B, D_IN), jnp.float32)
    out = jax.block_until_ready(simple_model_linear(x, params))
    ref = reference(x, params)
    assert out.shape == (B, D_OUT)
    # Slightly loosened tolerance: softmax denominator uses approx EUP reciprocal.
    assert jnp.allclose(out, ref, atol=1e-3, rtol=1e-3)
    assert jnp.allclose(jnp.sum(out, axis=1), 1.0, atol=1e-2)

    # Non-divisible batch exercising the partial tail tile (writes to OOB rows dropped).
    B2 = 37
    x2 = jax.random.normal(k_x2, (B2, D_IN), jnp.float32)
    out2 = jax.block_until_ready(simple_model_linear(x2, params, tile_b=16))
    ref2 = reference(x2, params)
    assert out2.shape == (B2, D_OUT)
    assert jnp.allclose(out2, ref2, atol=1e-3, rtol=1e-3)

    print("KERNEL_OK")
</pallas_src>

<mosaic_0001>
module attributes {stable_mosaic.version = 11 : i64} {
  func.func @mlp_kernel(%arg0: i32, %arg1: memref<8x256xf32, #tpu.memory_space<vmem>>, %arg2: memref<256x64xf32, #tpu.memory_space<vmem>>, %arg3: memref<1x64xf32, #tpu.memory_space<vmem>>, %arg4: memref<64x16xf32, #tpu.memory_space<vmem>>, %arg5: memref<1x16xf32, #tpu.memory_space<vmem>>, %arg6: memref<16x4xf32, #tpu.memory_space<vmem>>, %arg7: memref<1x4xf32, #tpu.memory_space<vmem>>, %arg8: memref<8x4xf32, #tpu.memory_space<vmem>>) attributes {dimension_semantics = [#tpu.dimension_semantics<parallel>], iteration_bounds = array<i64: 1>, scalar_prefetch = 0 : i64, scratch_operands = 0 : i64, tpu.core_type = #tpu.core_type<tc>, window_params = [{transform_indices = @transform_0, window_bounds = array<i64: 8, 256>}, {pipeline_mode = #tpu.pipeline_mode<synchronous>, transform_indices = @transform_1, window_bounds = array<i64: 256, 64>}, {pipeline_mode = #tpu.pipeline_mode<synchronous>, transform_indices = @transform_2, window_bounds = array<i64: 1, 64>}, {pipeline_mode = #tpu.pipeline_mode<synchronous>, transform_indices = @transform_3, window_bounds = array<i64: 64, 16>}, {pipeline_mode = #tpu.pipeline_mode<synchronous>, transform_indices = @transform_4, window_bounds = array<i64: 1, 16>}, {pipeline_mode = #tpu.pipeline_mode<synchronous>, transform_indices = @transform_5, window_bounds = array<i64: 16, 4>}, {pipeline_mode = #tpu.pipeline_mode<synchronous>, transform_indices = @transform_6, window_bounds = array<i64: 1, 4>}, {transform_indices = @transform_7, window_bounds = array<i64: 8, 4>}]} {
    %c0 = arith.constant 0 : index
    %c0_0 = arith.constant 0 : index
    %0 = vector.load %arg1[%c0, %c0_0] : memref<8x256xf32, #tpu.memory_space<vmem>>, vector<8x256xf32>
    %c0_1 = arith.constant 0 : index
    %c0_2 = arith.constant 0 : index
    %1 = vector.load %arg2[%c0_1, %c0_2] : memref<256x64xf32, #tpu.memory_space<vmem>>, vector<256x64xf32>
    %cst = arith.constant dense<0.000000e+00> : vector<8x64xf32>
    %2 = tpu.matmul %0, %1, %cst {dimension_numbers = #tpu.dot_dimension_numbers<[1], [0], [0], [1], [0, 0, 1, 1], [], []>} : vector<8x256xf32>, vector<256x64xf32>, vector<8x64xf32> -> vector<8x64xf32>
    %c0_3 = arith.constant 0 : index
    %c0_4 = arith.constant 0 : index
    %3 = vector.load %arg3[%c0_3, %c0_4] : memref<1x64xf32, #tpu.memory_space<vmem>>, vector<1x64xf32>
    %4 = vector.broadcast %3 : vector<1x64xf32> to vector<8x64xf32>
    %5 = arith.addf %2, %4 : vector<8x64xf32>
    %cst_5 = arith.constant 0.000000e+00 : f32
    %6 = vector.broadcast %cst_5 : f32 to vector<8x64xf32>
    %7 = arith.maximumf %5, %6 : vector<8x64xf32>
    %c0_6 = arith.constant 0 : index
    %c0_7 = arith.constant 0 : index
    %8 = vector.load %arg4[%c0_6, %c0_7] : memref<64x16xf32, #tpu.memory_space<vmem>>, vector<64x16xf32>
    %cst_8 = arith.constant dense<0.000000e+00> : vector<8x16xf32>
    %9 = tpu.matmul %7, %8, %cst_8 {dimension_numbers = #tpu.dot_dimension_numbers<[1], [0], [0], [1], [0, 0, 1, 1], [], []>} : vector<8x64xf32>, vector<64x16xf32>, vector<8x16xf32> -> vector<8x16xf32>
    %c0_9 = arith.constant 0 : index
    %c0_10 = arith.constant 0 : index
    %10 = vector.load %arg5[%c0_9, %c0_10] : memref<1x16xf32, #tpu.memory_space<vmem>>, vector<1x16xf32>
    %11 = vector.broadcast %10 : vector<1x16xf32> to vector<8x16xf32>
    %12 = arith.addf %9, %11 : vector<8x16xf32>
    %13 = math.tanh %12 : vector<8x16xf32>
    %c0_11 = arith.constant 0 : index
    %c0_12 = arith.constant 0 : index
    %14 = vector.load %arg6[%c0_11, %c0_12] : memref<16x4xf32, #tpu.memory_space<vmem>>, vector<16x4xf32>
    %cst_13 = arith.constant dense<0.000000e+00> : vector<8x4xf32>
    %15 = tpu.matmul %13, %14, %cst_13 {dimension_numbers = #tpu.dot_dimension_numbers<[1], [0], [0], [1], [0, 0, 1, 1], [], []>} : vector<8x16xf32>, vector<16x4xf32>, vector<8x4xf32> -> vector<8x4xf32>
    %c0_14 = arith.constant 0 : index
    %c0_15 = arith.constant 0 : index
    %16 = vector.load %arg7[%c0_14, %c0_15] : memref<1x4xf32, #tpu.memory_space<vmem>>, vector<1x4xf32>
    %17 = vector.broadcast %16 : vector<1x4xf32> to vector<8x4xf32>
    %18 = arith.addf %15, %17 : vector<8x4xf32>
    %cst_16 = arith.constant dense<0xFF800000> : vector<8xf32>
    %19 = vector.multi_reduction <maximumf>, %18, %cst_16 [1] : vector<8x4xf32> to vector<8xf32>
    %20 = vector.shape_cast %19 : vector<8xf32> to vector<8x1xf32>
    %21 = vector.broadcast %20 : vector<8x1xf32> to vector<8x4xf32>
    %22 = arith.subf %18, %21 : vector<8x4xf32>
    %23 = math.exp %22 : vector<8x4xf32>
    %cst_17 = arith.constant dense<0.000000e+00> : vector<8xf32>
    %24 = vector.multi_reduction <add>, %23, %cst_17 [1] : vector<8x4xf32> to vector<8xf32>
    %25 = vector.shape_cast %24 : vector<8xf32> to vector<8x1xf32>
    %26 = tpu.reciprocal %25 {approx = true} : vector<8x1xf32> -> vector<8x1xf32>
    %27 = vector.broadcast %26 : vector<8x1xf32> to vector<8x4xf32>
    %28 = arith.mulf %23, %27 : vector<8x4xf32>
    %c0_18 = arith.constant 0 : index
    %c0_19 = arith.constant 0 : index
    %29 = vector.load %arg8[%c0_18, %c0_19] : memref<8x4xf32, #tpu.memory_space<vmem>>, vector<8x4xf32>
    tpu.vector_store %arg8[%c0_18, %c0_19], %28 {strides = array<i32>} : memref<8x4xf32, #tpu.memory_space<vmem>>, vector<8x4xf32>,
    return
  }
  func.func @transform_0(%arg0: i32) -> (i32, i32) {
    %c0_i32 = arith.constant 0 : i32
    %c0_i32_0 = arith.constant 0 : i32
    return %arg0, %c0_i32 : i32, i32
  }
  func.func @transform_1(%arg0: i32) -> (i32, i32) {
    %c0_i32 = arith.constant 0 : i32
    %c0_i32_0 = arith.constant 0 : i32
    %c0_i32_1 = arith.constant 0 : i32
    return %c0_i32, %c0_i32_0 : i32, i32
  }
  func.func @transform_2(%arg0: i32) -> (i32, i32) {
    %c0_i32 = arith.constant 0 : i32
    %c0_i32_0 = arith.constant 0 : i32
    %c0_i32_1 = arith.constant 0 : i32
    return %c0_i32, %c0_i32_0 : i32, i32
  }
  func.func @transform_3(%arg0: i32) -> (i32, i32) {
    %c0_i32 = arith.constant 0 : i32
    %c0_i32_0 = arith.constant 0 : i32
    %c0_i32_1 = arith.constant 0 : i32
    return %c0_i32, %c0_i32_0 : i32, i32
  }
  func.func @transform_4(%arg0: i32) -> (i32, i32) {
    %c0_i32 = arith.constant 0 : i32
    %c0_i32_0 = arith.constant 0 : i32
    %c0_i32_1 = arith.constant 0 : i32
    return %c0_i32, %c0_i32_0 : i32, i32
  }
  func.func @transform_5(%arg0: i32) -> (i32, i32) {
    %c0_i32 = arith.constant 0 : i32
    %c0_i32_0 = arith.constant 0 : i32
    %c0_i32_1 = arith.constant 0 : i32
    return %c0_i32, %c0_i32_0 : i32, i32
  }
  func.func @transform_6(%arg0: i32) -> (i32, i32) {
    %c0_i32 = arith.constant 0 : i32
    %c0_i32_0 = arith.constant 0 : i32
    %c0_i32_1 = arith.constant 0 : i32
    return %c0_i32, %c0_i32_0 : i32, i32
  }
  func.func @transform_7(%arg0: i32) -> (i32, i32) {
    %c0_i32 = arith.constant 0 : i32
    %c0_i32_0 = arith.constant 0 : i32
    return %arg0, %c0_i32 : i32, i32
  }
}

</mosaic_0001>

<llo_original>
// kernel: tpu_custom_call.1
$region0: #{tpu_custom_call.1}
  #allocation0 [shape = 'u32[]', space=smem, size = 0x4, offset = 0x4, fixed_abs, tag = 'smem constant byte address 0x4 - core index']
  #allocation1 [shape = 'u32[144,128]{1,0:T(1,128)}', space=vmem, size = 0x12000, scoped, tag = 'internal scratch']
  %s0 = inlined_call_operand.vmem [shape: f32[8,256], index: 0, kind: input, shape index: {}]
  %s1 = inlined_call_operand.vmem [shape: f32[256,64], index: 1, kind: input, shape index: {}]
  %s2 = inlined_call_operand.vmem [shape: f32[1,64], index: 2, kind: input, shape index: {}]
  %s3 = inlined_call_operand.vmem [shape: f32[64,16], index: 3, kind: input, shape index: {}]
  %s4 = inlined_call_operand.vmem [shape: f32[1,16], index: 4, kind: input, shape index: {}]
  %s5 = inlined_call_operand.vmem [shape: f32[16,4], index: 5, kind: input, shape index: {}]
  %s6 = inlined_call_operand.vmem [shape: f32[1,4], index: 6, kind: input, shape index: {}]
  %s7 = inlined_call_operand.vmem [shape: f32[8,4], index: 7, kind: output, shape index: {}]
  %s8 = sld [smem:[#allocation0]]
  $region38: #{tpu_custom_call.1} parent=0
    _
  %s10 = ssub.s32 1, %s8
  %s11 = scalar_select 0, %s10, %s8
  // Predicated region
  $region2: #{tpu_custom_call.1} parent=0 // pred_check
    _
  $region3: #{tpu_custom_call.1} parent=0 // pred_check_branch
    %13 = sbr.rel (0) target = $region5
  $region4: #{tpu_custom_call.1} parent=0 // pred_region
    _
  $region5: #{tpu_custom_call.1} parent=0 // pred_fallthru
    _
  // Predicated region
  $region6: #{tpu_custom_call.1} parent=0 // pred_check
    _
  $region7: #{tpu_custom_call.1} parent=0 // pred_check_branch
    %15 = sbr.rel (0) target = $region9
  $region8: #{tpu_custom_call.1} parent=0 // pred_region
    _
  $region9: #{tpu_custom_call.1} parent=0 // pred_fallthru
    _
  // Predicated region
  $region10: #{tpu_custom_call.1} parent=0 // pred_check
    _
  $region11: #{tpu_custom_call.1} parent=0 // pred_check_branch
    %17 = sbr.rel (0) target = $region13
  $region12: #{tpu_custom_call.1} parent=0 // pred_region
    _
  $region13: #{tpu_custom_call.1} parent=0 // pred_fallthru
    _
  // Predicated region
  $region14: #{tpu_custom_call.1} parent=0 // pred_check
    _
  $region15: #{tpu_custom_call.1} parent=0 // pred_check_branch
    %19 = sbr.rel (0) target = $region17
  $region16: #{tpu_custom_call.1} parent=0 // pred_region
    _
  $region17: #{tpu_custom_call.1} parent=0 // pred_fallthru
    _
  // Predicated region
  $region18: #{tpu_custom_call.1} parent=0 // pred_check
    _
  $region19: #{tpu_custom_call.1} parent=0 // pred_check_branch
    %21 = sbr.rel (0) target = $region21
  $region20: #{tpu_custom_call.1} parent=0 // pred_region
    _
  $region21: #{tpu_custom_call.1} parent=0 // pred_fallthru
    _
  // Predicated region
  $region22: #{tpu_custom_call.1} parent=0 // pred_check
    _
  $region23: #{tpu_custom_call.1} parent=0 // pred_check_branch
    %23 = sbr.rel (0) target = $region25
  $region24: #{tpu_custom_call.1} parent=0 // pred_region
    _
  $region25: #{tpu_custom_call.1} parent=0 // pred_fallthru
    _
  // Predicated region
  $region26: #{tpu_custom_call.1} parent=0 // pred_check
    _
  $region27: #{tpu_custom_call.1} parent=0 // pred_check_branch
    %25 = sbr.rel (0) target = $region29
  $region28: #{tpu_custom_call.1} parent=0 // pred_region
    _
  $region29: #{tpu_custom_call.1} parent=0 // pred_fallthru
    _
  %v26 = vld [vmem:[%s0] sm:$0xff]
  %v27 = vld [vmem:[%s0 + $0x8] sm:$0xff]
  %v28 = vld [vmem:[%s1] sm:$0xff]
  %v29 = vld [vmem:[%s1 + $0x8] sm:$0xff]
  %v30 = vld [vmem:[%s1 + $0x10] sm:$0xff]
  %v31 = vld [vmem:[%s1 + $0x18] sm:$0xff]
  %v32 = vld [vmem:[%s1 + $0x20] sm:$0xff]
  %v33 = vld [vmem:[%s1 + $0x28] sm:$0xff]
  %v34 = vld [vmem:[%s1 + $0x30] sm:$0xff]
  %v35 = vld [vmem:[%s1 + $0x38] sm:$0xff]
  %v36 = vld [vmem:[%s1 + $0x40] sm:$0xff]
  %v37 = vld [vmem:[%s1 + $0x48] sm:$0xff]
  %v38 = vld [vmem:[%s1 + $0x50] sm:$0xff]
  %v39 = vld [vmem:[%s1 + $0x58] sm:$0xff]
  %v40 = vld [vmem:[%s1 + $0x60] sm:$0xff]
  %v41 = vld [vmem:[%s1 + $0x68] sm:$0xff]
  %v42 = vld [vmem:[%s1 + $0x70] sm:$0xff]
  %v43 = vld [vmem:[%s1 + $0x78] sm:$0xff]
  %v44 = vld [vmem:[%s1 + $0x80] sm:$0xff]
  %v45 = vld [vmem:[%s1 + $0x88] sm:$0xff]
  %v46 = vld [vmem:[%s1 + $0x90] sm:$0xff]
  %v47 = vld [vmem:[%s1 + $0x98] sm:$0xff]
  %v48 = vld [vmem:[%s1 + $0xa0] sm:$0xff]
  %v49 = vld [vmem:[%s1 + $0xa8] sm:$0xff]
  %v50 = vld [vmem:[%s1 + $0xb0] sm:$0xff]
  %v51 = vld [vmem:[%s1 + $0xb8] sm:$0xff]
  %v52 = vld [vmem:[%s1 + $0xc0] sm:$0xff]
  %v53 = vld [vmem:[%s1 + $0xc8] sm:$0xff]
  %v54 = vld [vmem:[%s1 + $0xd0] sm:$0xff]
  %v55 = vld [vmem:[%s1 + $0xd8] sm:$0xff]
  %v56 = vld [vmem:[%s1 + $0xe0] sm:$0xff]
  %v57 = vld [vmem:[%s1 + $0xe8] sm:$0xff]
  %v58 = vld [vmem:[%s1 + $0xf0] sm:$0xff]
  %v59 = vld [vmem:[%s1 + $0xf8] sm:$0xff]
  %v60 = vld [vmem:[%s2] sm:$0x1]
  %v62 = vlaneseq
  %v63 = vshrl.u32 %v62, 7
  %v64 = vsub.s32 0, %v63
  %v65 = vrot.slane %v60, %v64
  %67 = vmatprep.subr.mxu0 0.0
  %68 = vmatpush1.msra.mxu0 %v28
  %69 = vmatprep.subr.mxu0 0.0
  %70 = vmatpush1.msra.mxu0 %v29
  %71 = vmatprep.subr.mxu0 0.0
  %72 = vmatpush1.msra.mxu0 %v30
  %73 = vmatprep.subr.mxu0 0.0
  %74 = vmatpush1.msra.mxu0 %v31
  %75 = vmatprep.subr.mxu0 0.0
  %76 = vmatpush1.msra.mxu0 %v32
  %77 = vmatprep.subr.mxu0 0.0
  %78 = vmatpush1.msra.mxu0 %v33
  %79 = vmatprep.subr.mxu0 0.0
  %80 = vmatpush1.msra.mxu0 %v34
  %81 = vmatprep.subr.mxu0 0.0
  %82 = vmatpush1.msra.mxu0 %v35
  %83 = vmatprep.subr.mxu0 0.0
  %84 = vmatpush1.msra.mxu0 %v36
  %85 = vmatprep.subr.mxu0 0.0
  %86 = vmatpush1.msra.mxu0 %v37
  %87 = vmatprep.subr.mxu0 0.0
  %88 = vmatpush1.msra.mxu0 %v38
  %89 = vmatprep.subr.mxu0 0.0
  %90 = vmatpush1.msra.mxu0 %v39
  %91 = vmatprep.subr.mxu0 0.0
  %92 = vmatpush1.msra.mxu0 %v40
  %93 = vmatprep.subr.mxu0 0.0
  %94 = vmatpush1.msra.mxu0 %v41
  %95 = vmatprep.subr.mxu0 0.0
  %96 = vmatpush1.msra.mxu0 %v42
  %97 = vmatprep.subr.mxu0 0.0
  %98 = vmatpush1.msra.mxu0 %v43
  %99 = vmatprep.subr.mxu0 0.0
  %100 = vmatpush1.msra.mxu0 %v44
  %101 = vmatprep.subr.mxu0 0.0
  %102 = vmatpush1.msra.mxu0 %v45
  %103 = vmatprep.subr.mxu0 0.0
  %104 = vmatpush1.msra.mxu0 %v46
  %105 = vmatprep.subr.mxu0 0.0
  %106 = vmatpush1.msra.mxu0 %v47
  %107 = vmatprep.subr.mxu0 0.0
  %108 = vmatpush1.msra.mxu0 %v48
  %109 = vmatprep.subr.mxu0 0.0
  %110 = vmatpush1.msra.mxu0 %v49
  %111 = vmatprep.subr.mxu0 0.0
  %112 = vmatpush1.msra.mxu0 %v50
  %113 = vmatprep.subr.mxu0 0.0
  %114 = vmatpush1.msra.mxu0 %v51
  %115 = vmatprep.subr.mxu0 0.0
  %116 = vmatpush1.msra.mxu0 %v52
  %117 = vmatprep.subr.mxu0 0.0
  %118 = vmatpush1.msra.mxu0 %v53
  %119 = vmatprep.subr.mxu0 0.0
  %120 = vmatpush1.msra.mxu0 %v54
  %121 = vmatprep.subr.mxu0 0.0
  %122 = vmatpush1.msra.mxu0 %v55
  %123 = vmatprep.subr.mxu0 0.0
  %124 = vmatpush1.msra.mxu0 %v56
  %125 = vmatprep.subr.mxu0 0.0
  %126 = vmatpush1.msra.mxu0 %v57
  %127 = vmatprep.subr.mxu0 0.0
  %128 = vmatpush1.msra.mxu0 %v58
  %129 = vmatprep.subr.mxu0 0.0
  %130 = vmatpush1.msra.mxu0 %v59
  %131 = vmatprep.mubr.f32.mxu0 %v27
  %132 = vmatmul.mubr.f32.gmra.mrb[0].mxu0 %v26
  %v133 = vpop.f32.mrb[0].mxu0
  %v134 = vadd.f32 %v65, %v133
  %v135 = vpop.f32.mrb[0].mxu0
  %136 = vdwg.mxu0
  %v137 = vmax.f32 %v134, 0.0
  %v138 = vld [vmem:[%s3] sm:$0xff]
  %v139 = vld [vmem:[%s3 + $0x8] sm:$0xff]
  %v140 = vld [vmem:[%s3 + $0x10] sm:$0xff]
  %v141 = vld [vmem:[%s3 + $0x18] sm:$0xff]
  %v142 = vld [vmem:[%s3 + $0x20] sm:$0xff]
  %v143 = vld [vmem:[%s3 + $0x28] sm:$0xff]
  %v144 = vld [vmem:[%s3 + $0x30] sm:$0xff]
  %v145 = vld [vmem:[%s3 + $0x38] sm:$0xff]
  %v146 = vld [vmem:[%s4] sm:$0x1]
  %v148 = vlaneseq
  %v149 = vshrl.u32 %v148, 7
  %v150 = vsub.s32 0, %v149
  %v151 = vrot.slane %v146, %v150
  %vm153 = vcmask 523264
  %v155 = vsel %vm153, %v137, 0
  %157 = vmatprep.subr.mxu0 0.0
  %158 = vmatpush1.msra.mxu0 %v138
  %159 = vmatprep.subr.mxu0 0.0
  %160 = vmatpush1.msra.mxu0 %v139
  %161 = vmatprep.subr.mxu0 0.0
  %162 = vmatpush1.msra.mxu0 %v140
  %163 = vmatprep.subr.mxu0 0.0
  %164 = vmatpush1.msra.mxu0 %v141
  %165 = vmatprep.subr.mxu0 0.0
  %166 = vmatpush1.msra.mxu0 %v142
  %167 = vmatprep.subr.mxu0 0.0
  %168 = vmatpush1.msra.mxu0 %v143
  %169 = vmatprep.subr.mxu0 0.0
  %170 = vmatpush1.msra.mxu0 %v144
  %171 = vmatprep.subr.mxu0 0.0
  %172 = vmatpush1.msra.mxu0 %v145
  %173 = vmatprep.subr.mxu0 0.0
  %174 = vmatpush1.msra.mxu0 0.0
  %175 = vmatprep.subr.mxu0 0.0
  %176 = vmatpush1.msra.mxu0 0.0
  %177 = vmatprep.subr.mxu0 0.0
  %178 = vmatpush1.msra.mxu0 0.0
  %179 = vmatprep.subr.mxu0 0.0
  %180 = vmatpush1.msra.mxu0 0.0
  %181 = vmatprep.subr.mxu0 0.0
  %182 = vmatpush1.msra.mxu0 0.0
  %183 = vmatprep.subr.mxu0 0.0
  %184 = vmatpush1.msra.mxu0 0.0
  %185 = vmatprep.subr.mxu0 0.0
  %186 = vmatpush1.msra.mxu0 0.0
  %187 = vmatprep.subr.mxu0 0.0
  %188 = vmatpush1.msra.mxu0 0.0
  %189 = vmatprep.subr.mxu0 0.0
  %190 = vmatpush1.msra.mxu0 0.0
  %191 = vmatprep.subr.mxu0 0.0
  %192 = vmatpush1.msra.mxu0 0.0
  %193 = vmatprep.subr.mxu0 0.0
  %194 = vmatpush1.msra.mxu0 0.0
  %195 = vmatprep.subr.mxu0 0.0
  %196 = vmatpush1.msra.mxu0 0.0
  %197 = vmatprep.subr.mxu0 0.0
  %198 = vmatpush1.msra.mxu0 0.0
  %199 = vmatprep.subr.mxu0 0.0
  %200 = vmatpush1.msra.mxu0 0.0
  %201 = vmatprep.subr.mxu0 0.0
  %202 = vmatpush1.msra.mxu0 0.0
  %203 = vmatprep.subr.mxu0 0.0
  %204 = vmatpush1.msra.mxu0 0.0
  %205 = vmatprep.subr.mxu0 0.0
  %206 = vmatpush1.msra.mxu0 0.0
  %207 = vmatprep.subr.mxu0 0.0
  %208 = vmatpush1.msra.mxu0 0.0
  %209 = vmatprep.subr.mxu0 0.0
  %210 = vmatpush1.msra.mxu0 0.0
  %211 = vmatprep.subr.mxu0 0.0
  %212 = vmatpush1.msra.mxu0 0.0
  %213 = vmatprep.subr.mxu0 0.0
  %214 = vmatpush1.msra.mxu0 0.0
  %215 = vmatprep.subr.mxu0 0.0
  %216 = vmatpush1.msra.mxu0 0.0
  %217 = vmatprep.subr.mxu0 0.0
  %218 = vmatpush1.msra.mxu0 0.0
  %219 = vmatprep.subr.mxu0 0.0
  %220 = vmatpush1.msra.mxu0 0.0
  %221 = vmatprep.mubr.f32.mxu0 0.0
  %222 = vmatmul.mubr.f32.gmra.mrb[0].mxu0 %v155
  %v223 = vpop.f32.mrb[0].mxu0
  %v224 = vadd.f32 %v151, %v223
  %v225 = vpop.f32.mrb[0].mxu0
  %226 = vdwg.mxu0
  %v227 = vtanh.pop %v224
  %v228 = vld [vmem:[%s5] sm:$0xff]
  %v229 = vld [vmem:[%s5 + $0x8] sm:$0xff]
  %v230 = vld [vmem:[%s6] sm:$0x1]
  %v232 = vlaneseq
  %v233 = vshrl.u32 %v232, 7
  %v234 = vsub.s32 0, %v233
  %v235 = vrot.slane %v230, %v234
  %vm237 = vcmask 130048
  %v239 = vsel %vm237, %v227, 0
  %241 = vmatprep.subr.mxu0 0.0
  %242 = vmatpush1.msra.mxu0 %v228
  %243 = vmatprep.subr.mxu0 0.0
  %244 = vmatpush1.msra.mxu0 %v229
  %245 = vmatprep.subr.mxu0 0.0
  %246 = vmatpush1.msra.mxu0 0.0
  %247 = vmatprep.subr.mxu0 0.0
  %248 = vmatpush1.msra.mxu0 0.0
  %249 = vmatprep.subr.mxu0 0.0
  %250 = vmatpush1.msra.mxu0 0.0
  %251 = vmatprep.subr.mxu0 0.0
  %252 = vmatpush1.msra.mxu0 0.0
  %253 = vmatprep.subr.mxu0 0.0
  %254 = vmatpush1.msra.mxu0 0.0
  %255 = vmatprep.subr.mxu0 0.0
  %256 = vmatpush1.msra.mxu0 0.0
  %257 = vmatprep.subr.mxu0 0.0
  %258 = vmatpush1.msra.mxu0 0.0
  %259 = vmatprep.subr.mxu0 0.0
  %260 = vmatpush1.msra.mxu0 0.0
  %261 = vmatprep.subr.mxu0 0.0
  %262 = vmatpush1.msra.mxu0 0.0
  %263 = vmatprep.subr.mxu0 0.0
  %264 = vmatpush1.msra.mxu0 0.0
  %265 = vmatprep.subr.mxu0 0.0
  %266 = vmatpush1.msra.mxu0 0.0
  %267 = vmatprep.subr.mxu0 0.0
  %268 = vmatpush1.msra.mxu0 0.0
  %269 = vmatprep.subr.mxu0 0.0
  %270 = vmatpush1.msra.mxu0 0.0
  %271 = vmatprep.subr.mxu0 0.0
  %272 = vmatpush1.msra.mxu0 0.0
  %273 = vmatprep.subr.mxu0 0.0
  %274 = vmatpush1.msra.mxu0 0.0
  %275 = vmatprep.subr.mxu0 0.0
  %276 = vmatpush1.msra.mxu0 0.0
  %277 = vmatprep.subr.mxu0 0.0
  %278 = vmatpush1.msra.mxu0 0.0
  %279 = vmatprep.subr.mxu0 0.0
  %280 = vmatpush1.msra.mxu0 0.0
  %281 = vmatprep.subr.mxu0 0.0
  %282 = vmatpush1.msra.mxu0 0.0
  %283 = vmatprep.subr.mxu0 0.0
  %284 = vmatpush1.msra.mxu0 0.0
  %285 = vmatprep.subr.mxu0 0.0
  %286 = vmatpush1.msra.mxu0 0.0
  %287 = vmatprep.subr.mxu0 0.0
  %288 = vmatpush1.msra.mxu0 0.0
  %289 = vmatprep.subr.mxu0 0.0
  %290 = vmatpush1.msra.mxu0 0.0
  %291 = vmatprep.subr.mxu0 0.0
  %292 = vmatpush1.msra.mxu0 0.0
  %293 = vmatprep.subr.mxu0 0.0
  %294 = vmatpush1.msra.mxu0 0.0
  %295 = vmatprep.subr.mxu0 0.0
  %296 = vmatpush1.msra.mxu0 0.0
  %297 = vmatprep.subr.mxu0 0.0
  %298 = vmatpush1.msra.mxu0 0.0
  %299 = vmatprep.subr.mxu0 0.0
  %300 = vmatpush1.msra.mxu0 0.0
  %301 = vmatprep.subr.mxu0 0.0
  %302 = vmatpush1.msra.mxu0 0.0
  %303 = vmatprep.subr.mxu0 0.0
  %304 = vmatpush1.msra.mxu0 0.0
  %305 = vmatprep.mubr.f32.mxu0 0.0
  %306 = vmatmul.mubr.f32.gmra.mrb[0].mxu0 %v239
  %v307 = vpop.f32.mrb[0].mxu0
  %v308 = vadd.f32 %v235, %v307
  %v309 = vpop.f32.mrb[0].mxu0
  %310 = vdwg.mxu0
  %vm311 = vcmask 31744
  %v312 = vsel %vm311, %v308, -inf
  %313 = vmax.xlane.f32.xlu0 %v312
  %v314 = vpop.xlane.xlu0 %313
  %v315 = vsub.f32 %v308, %v314
  %v316 = vmul.f32 %v315, 1.442695
  %v317 = vpow.pop %v316
  %v318 = vsel %vm311, %v317, 0.0
  %319 = vadd.xlane.f32.xlu0 %v318
  %v320 = vpop.xlane.xlu0 %319
  %v321 = vrcp.pop %v320
  %v322 = vmul.f32 %v317, %v321
  %323 = vst.msk [vmem:[%s7] sm:$0xff] %vm311, %v322
  // Predicated region
  $region30: #{tpu_custom_call.1} parent=0 // pred_check
    _
  $region31: #{tpu_custom_call.1} parent=0 // pred_check_branch
    %325 = sbr.rel (0) target = $region33
  $region32: #{tpu_custom_call.1} parent=0 // pred_region
    _
  $region33: #{tpu_custom_call.1} parent=0 // pred_fallthru
    _
  // Predicated region
  $region34: #{tpu_custom_call.1} parent=0 // pred_check
    _
  $region35: #{tpu_custom_call.1} parent=0 // pred_check_branch
    %327 = sbr.rel (0) target = $region37
  $region36: #{tpu_custom_call.1} parent=0 // pred_region
    _
  $region37: #{tpu_custom_call.1} parent=0 // pred_fallthru
    _

</llo_original>
